<compile_context>
chip_gen: v6e
topology: v6e:2x2x1
jax: 0.10.0
libtpu: 0.0.40
codegen_flags: <defaults>
</compile_context>

<pallas_src>
import jax
import jax.numpy as jnp
from jax.experimental import pallas as pl
from jax.experimental.pallas import tpu as pltpu

_LANE = 128
_SUBLANE = 8
_VMEM_BUDGET = 40 * 1024 * 1024   # working-set budget (fits v7x's 64 MiB with headroom)
_VMEM_CAP = 48 * 1024 * 1024      # never request more than ~75% of v7x physical VMEM


def _round_up(x, m):
    return ((x + m - 1) // m) * m


def _make_kernel(num_hidden, lane_dense):
    """Fused MLP kernel. refs = (x_i, x_j, w0, b0, ..., w_last, b_last, out)."""

    def kernel(*refs):
        xi_ref, xj_ref = refs[0], refs[1]
        o_ref = refs[-1]
        lin = refs[2:-1]

        # Hadamard product of the two node embeddings (f32 math regardless of
        # the streaming dtype).
        x = xi_ref[...].astype(jnp.float32) * xj_ref[...].astype(jnp.float32)

        # Hidden layers: linear + relu.
        # TODO(synk): F.dropout is identity in eval mode; training-mode dropout
        # is not implemented here.
        for l in range(num_hidden):
            w, b = lin[2 * l][...], lin[2 * l + 1][...]
            x = jnp.maximum(
                jnp.dot(x, w, preferred_element_type=jnp.float32) + b, 0.0)

        w, b = lin[-2][...], lin[-1][...]
        if lane_dense:
            # Final layer in transposed orientation: (C_out, H) @ (H, blk)
            # -> (C_out, blk).  Batch lands on the 128-lane axis, so the
            # sigmoid runs on dense vregs and the store is unmasked/contiguous.
            # (x.T goes through the otherwise-idle XLU.)
            zt = jnp.dot(w, x.T, preferred_element_type=jnp.float32) + b
            o_ref[0] = jax.nn.sigmoid(zt).astype(o_ref.dtype)
        else:
            z = jnp.dot(x, w, preferred_element_type=jnp.float32) + b
            o_ref[...] = jax.nn.sigmoid(z).astype(o_ref.dtype)

    return kernel


def _bytes_per_row(c_in, widths, in_itemsize, n_in_buf):
    """Approximate lane-padded VMEM bytes per batch row."""
    inter = _round_up(c_in, _LANE) * 4 + sum(_round_up(w, _LANE) * 4 for w in widths)
    return (2 * n_in_buf * _round_up(c_in, _LANE) * in_itemsize  # x_i/x_j stream buffers
            + inter                                              # f32 intermediates
            + 2 * _SUBLANE * 4)                                  # lane-dense out tile (2 bufs)


def _weight_bytes(params):
    total = 0
    for w, b in params:
        total += _round_up(w.shape[0], _SUBLANE) * _round_up(w.shape[1], _LANE) * 4
        total += _SUBLANE * _round_up(max(b.shape), _LANE) * 4
    return 2 * total                                             # double-buffered


def _choose_block(batch, block_b, row_bytes):
    cap = max(_SUBLANE, _VMEM_BUDGET // row_bytes)
    target = max(_SUBLANE, min(block_b, cap))
    if batch <= target:
        return batch                     # one full-array tile (always layout-legal)
    n_steps = -(-batch // target)
    blk = -(-batch // n_steps)           # balanced steps (dual-TC v7x load balance)
    gran = 512 if blk >= 512 else _SUBLANE
    blk = _round_up(blk, gran)
    return batch if blk >= batch else blk


def link_predictor_forward(x_i, x_j, params, *, block_b=8192, input_buffers=None):
    """Fused MLP link predictor, tiled over the batch (edge) axis.

    block_b:       target rows per grid step for large batches (sweep 4K-16K).
    input_buffers: optional pipeline depth for the x_i/x_j streams
                   (None -> default double buffering; try 3 on v7x).
    """
    B, C_in = x_i.shape
    C_out = params[-1][0].shape[1]
    num_hidden = len(params) - 1
    lane_dense = (C_out == 1)

    widths = [w.shape[1] for w, _ in params]
    n_in_buf = 2 if input_buffers is None else input_buffers
    row_bytes = _bytes_per_row(C_in, widths, x_i.dtype.itemsize, n_in_buf)

    blk = _choose_block(B, block_b, row_bytes)
    num_tiles = pl.cdiv(B, blk)

    # Scoped-VMEM request: lane-padding-aware estimate, capped below v7x's
    # 64 MiB physical VMEM.  Only set explicitly when the default would be tight.
    vmem_est = row_bytes * blk + _weight_bytes(params)
    vmem_limit = None
    if vmem_est > 12 * 1024 * 1024:
        vmem_limit = min(int(vmem_est * 1.3) + (2 << 20), _VMEM_CAP)
    compiler_params = pltpu.CompilerParams(
        dimension_semantics=("parallel",),
        vmem_limit_bytes=vmem_limit)

    def stream_spec():
        if input_buffers is None:
            return pl.BlockSpec((blk, C_in), lambda i: (i, 0))
        return pl.BlockSpec((blk, C_in), lambda i: (i, 0),
                            pipeline_mode=pl.Buffered(input_buffers))

    def full_spec(shape):
        nd = len(shape)
        return pl.BlockSpec(shape, lambda i: (0,) * nd)   # resident (constant block)

    weight_args, weight_specs = [], []
    for w, b in params[:-1]:
        weight_args += [w, b]
        weight_specs += [full_spec(w.shape), full_spec(b.shape)]
    w_last, b_last = params[-1]
    if lane_dense:
        w_last = jnp.transpose(w_last)   # (C_out, H) -- tiny one-time transpose
        b_last = jnp.transpose(b_last)   # (C_out, 1)
    weight_args += [w_last, b_last]
    weight_specs += [full_spec(w_last.shape), full_spec(b_last.shape)]

    kernel = _make_kernel(num_hidden, lane_dense)

    if lane_dense:
        out_shape = jax.ShapeDtypeStruct((num_tiles, 1, blk), jnp.float32)
        out_spec = pl.BlockSpec((1, 1, blk), lambda i: (i, 0, 0))
    else:
        out_shape = jax.ShapeDtypeStruct((B, C_out), jnp.float32)
        out_spec = pl.BlockSpec((blk, C_out), lambda i: (i, 0))

    out = pl.pallas_call(
        kernel,
        out_shape=out_shape,
        grid_spec=pl.GridSpec(
            grid=(num_tiles,),
            in_specs=[stream_spec(), stream_spec()] + weight_specs,
            out_specs=out_spec,
        ),
        compiler_params=compiler_params,
    )(x_i, x_j, *weight_args)

    if lane_dense:
        # Padded tail rows of the last (ragged) tile are sliced off here.
        out = out.reshape(num_tiles * blk, 1)[:B]
    return out


def init_params(key, in_channels, hidden_channels, out_channels, num_layers):
    """nn.Linear-style init: U(-1/sqrt(fan_in), 1/sqrt(fan_in)) for W and b."""
    sizes = [in_channels] + [hidden_channels] * (num_layers - 1) + [out_channels]
    params = []
    for fan_in, fan_out in zip(sizes[:-1], sizes[1:]):
        key, kw, kb = jax.random.split(key, 3)
        bound = 1.0 / float(fan_in) ** 0.5
        w = jax.random.uniform(kw, (fan_in, fan_out), jnp.float32, -bound, bound)
        b = jax.random.uniform(kb, (1, fan_out), jnp.float32, -bound, bound)
        params.append((w, b))
    return params


def reference_forward(x_i, x_j, params):
    """Pure-JAX f32 reference matching the PyTorch module (eval mode)."""
    hp = jax.lax.Precision.HIGHEST
    x = x_i.astype(jnp.float32) * x_j.astype(jnp.float32)
    for w, b in params[:-1]:
        x = jnp.maximum(jnp.dot(x, w, precision=hp) + b, 0.0)
    w, b = params[-1]
    return jax.nn.sigmoid(jnp.dot(x, w, precision=hp) + b)


if __name__ == "__main__":
    # Small shapes consistent with the module: num_layers=3, dropout unused at
    # eval.  B deliberately NOT a multiple of common tile sizes.
    B = 300
    in_channels = 32
    hidden_channels = 32
    out_channels = 1
    num_layers = 3

    key = jax.random.PRNGKey(0)
    key, ki, kj = jax.random.split(key, 3)
    x_i = jax.random.normal(ki, (B, in_channels), jnp.float32)
    x_j = jax.random.normal(kj, (B, in_channels), jnp.float32)
    params = init_params(key, in_channels, hidden_channels, out_channels, num_layers)

    ref = reference_forward(x_i, x_j, params)

    # 1) Default path: single full-array tile (no forced split on 1-TC chips).
    out = jax.block_until_ready(link_predictor_forward(x_i, x_j, params))
    assert out.shape == (B, out_channels)
    assert jnp.allclose(out, ref, atol=1e-4, rtol=1e-4), "single-tile mismatch vs reference"

    # 2) Multi-tile path with a ragged last block (exercises remainder handling
    #    and the lane-dense tiled output).
    out_mt = jax.block_until_ready(
        link_predictor_forward(x_i, x_j, params, block_b=96))
    assert out_mt.shape == (B, out_channels)
    assert jnp.allclose(out_mt, ref, atol=1e-4, rtol=1e-4), "multi-tile mismatch vs reference"

    print("KERNEL_OK")
</pallas_src>

<mosaic_0001>
module attributes {stable_mosaic.version = 11 : i64} {
  func.func @kernel(%arg0: i32, %arg1: memref<300x32xf32, #tpu.memory_space<vmem>>, %arg2: memref<300x32xf32, #tpu.memory_space<vmem>>, %arg3: memref<32x32xf32, #tpu.memory_space<vmem>>, %arg4: memref<1x32xf32, #tpu.memory_space<vmem>>, %arg5: memref<32x32xf32, #tpu.memory_space<vmem>>, %arg6: memref<1x32xf32, #tpu.memory_space<vmem>>, %arg7: memref<1x32xf32, #tpu.memory_space<vmem>>, %arg8: memref<1x1xf32, #tpu.memory_space<vmem>>, %arg9: memref<1x1x300xf32, #tpu.memory_space<vmem>>) attributes {dimension_semantics = [#tpu.dimension_semantics<parallel>], iteration_bounds = array<i64: 1>, scalar_prefetch = 0 : i64, scratch_operands = 0 : i64, tpu.core_type = #tpu.core_type<tc>, window_params = [{transform_indices = @transform_0, window_bounds = array<i64: 300, 32>}, {transform_indices = @transform_1, window_bounds = array<i64: 300, 32>}, {pipeline_mode = #tpu.pipeline_mode<synchronous>, transform_indices = @transform_2, window_bounds = array<i64: 32, 32>}, {pipeline_mode = #tpu.pipeline_mode<synchronous>, transform_indices = @transform_3, window_bounds = array<i64: 1, 32>}, {pipeline_mode = #tpu.pipeline_mode<synchronous>, transform_indices = @transform_4, window_bounds = array<i64: 32, 32>}, {pipeline_mode = #tpu.pipeline_mode<synchronous>, transform_indices = @transform_5, window_bounds = array<i64: 1, 32>}, {pipeline_mode = #tpu.pipeline_mode<synchronous>, transform_indices = @transform_6, window_bounds = array<i64: 1, 32>}, {pipeline_mode = #tpu.pipeline_mode<synchronous>, transform_indices = @transform_7, window_bounds = array<i64: 1, 1>}, {transform_indices = @transform_8, window_bounds = array<i64: 1, 1, 300>}]} {
    %c0 = arith.constant 0 : index
    %c0_0 = arith.constant 0 : index
    %0 = vector.load %arg1[%c0, %c0_0] : memref<300x32xf32, #tpu.memory_space<vmem>>, vector<300x32xf32>
    %c0_1 = arith.constant 0 : index
    %c0_2 = arith.constant 0 : index
    %1 = vector.load %arg2[%c0_1, %c0_2] : memref<300x32xf32, #tpu.memory_space<vmem>>, vector<300x32xf32>
    %2 = arith.mulf %0, %1 : vector<300x32xf32>
    %c0_3 = arith.constant 0 : index
    %c0_4 = arith.constant 0 : index
    %3 = vector.load %arg3[%c0_3, %c0_4] : memref<32x32xf32, #tpu.memory_space<vmem>>, vector<32x32xf32>
    %c0_5 = arith.constant 0 : index
    %c0_6 = arith.constant 0 : index
    %4 = vector.load %arg4[%c0_5, %c0_6] : memref<1x32xf32, #tpu.memory_space<vmem>>, vector<1x32xf32>
    %cst = arith.constant dense<0.000000e+00> : vector<300x32xf32>
    %5 = tpu.matmul %2, %3, %cst {dimension_numbers = #tpu.dot_dimension_numbers<[1], [0], [0], [1], [0, 0, 1, 1], [], []>} : vector<300x32xf32>, vector<32x32xf32>, vector<300x32xf32> -> vector<300x32xf32>
    %6 = vector.broadcast %4 : vector<1x32xf32> to vector<300x32xf32>
    %7 = arith.addf %5, %6 : vector<300x32xf32>
    %cst_7 = arith.constant 0.000000e+00 : f32
    %8 = vector.broadcast %cst_7 : f32 to vector<300x32xf32>
    %9 = arith.maximumf %7, %8 : vector<300x32xf32>
    %c0_8 = arith.constant 0 : index
    %c0_9 = arith.constant 0 : index
    %10 = vector.load %arg5[%c0_8, %c0_9] : memref<32x32xf32, #tpu.memory_space<vmem>>, vector<32x32xf32>
    %c0_10 = arith.constant 0 : index
    %c0_11 = arith.constant 0 : index
    %11 = vector.load %arg6[%c0_10, %c0_11] : memref<1x32xf32, #tpu.memory_space<vmem>>, vector<1x32xf32>
    %cst_12 = arith.constant dense<0.000000e+00> : vector<300x32xf32>
    %12 = tpu.matmul %9, %10, %cst_12 {dimension_numbers = #tpu.dot_dimension_numbers<[1], [0], [0], [1], [0, 0, 1, 1], [], []>} : vector<300x32xf32>, vector<32x32xf32>, vector<300x32xf32> -> vector<300x32xf32>
    %13 = vector.broadcast %11 : vector<1x32xf32> to vector<300x32xf32>
    %14 = arith.addf %12, %13 : vector<300x32xf32>
    %cst_13 = arith.constant 0.000000e+00 : f32
    %15 = vector.broadcast %cst_13 : f32 to vector<300x32xf32>
    %16 = arith.maximumf %14, %15 : vector<300x32xf32>
    %c0_14 = arith.constant 0 : index
    %c0_15 = arith.constant 0 : index
    %17 = vector.load %arg7[%c0_14, %c0_15] : memref<1x32xf32, #tpu.memory_space<vmem>>, vector<1x32xf32>
    %c0_16 = arith.constant 0 : index
    %c0_17 = arith.constant 0 : index
    %18 = vector.load %arg8[%c0_16, %c0_17] : memref<1x1xf32, #tpu.memory_space<vmem>>, vector<1x1xf32>
    %19 = tpu.transpose %16, [1, 0] : vector<300x32xf32> -> vector<32x300xf32>
    %cst_18 = arith.constant dense<0.000000e+00> : vector<1x300xf32>
    %20 = tpu.matmul %17, %19, %cst_18 {dimension_numbers = #tpu.dot_dimension_numbers<[1], [0], [0], [1], [0, 0, 1, 1], [], []>} : vector<1x32xf32>, vector<32x300xf32>, vector<1x300xf32> -> vector<1x300xf32>
    %21 = vector.broadcast %18 : vector<1x1xf32> to vector<1x300xf32>
    %22 = arith.addf %20, %21 : vector<1x300xf32>
    %23 = arith.negf %22 : vector<1x300xf32>
    %24 = math.exp %23 : vector<1x300xf32>
    %cst_19 = arith.constant 1.000000e+00 : f32
    %25 = vector.broadcast %cst_19 : f32 to vector<1x300xf32>
    %26 = arith.addf %25, %24 : vector<1x300xf32>
    %27 = arith.divf %25, %26 : vector<1x300xf32>
    %c0_20 = arith.constant 0 : index
    %c0_21 = arith.constant 0 : index
    %c0_22 = arith.constant 0 : index
    %28 = vector.load %arg9[%c0_20, %c0_21, %c0_22] : memref<1x1x300xf32, #tpu.memory_space<vmem>>, vector<1x1x300xf32>
    %29 = vector.shape_cast %28 : vector<1x1x300xf32> to vector<1x300xf32>
    %30 = vector.shape_cast %27 : vector<1x300xf32> to vector<1x1x300xf32>
    tpu.vector_store %arg9[%c0_20, %c0_21, %c0_22], %30 {strides = array<i32>} : memref<1x1x300xf32, #tpu.memory_space<vmem>>, vector<1x1x300xf32>,
    return
  }
  func.func @transform_0(%arg0: i32) -> (i32, i32) {
    %c0_i32 = arith.constant 0 : i32
    %c0_i32_0 = arith.constant 0 : i32
    return %arg0, %c0_i32 : i32, i32
  }
  func.func @transform_1(%arg0: i32) -> (i32, i32) {
    %c0_i32 = arith.constant 0 : i32
    %c0_i32_0 = arith.constant 0 : i32
    return %arg0, %c0_i32 : i32, i32
  }
  func.func @transform_2(%arg0: i32) -> (i32, i32) {
    %c0_i32 = arith.constant 0 : i32
    %c0_i32_0 = arith.constant 0 : i32
    %c0_i32_1 = arith.constant 0 : i32
    return %c0_i32, %c0_i32_0 : i32, i32
  }
  func.func @transform_3(%arg0: i32) -> (i32, i32) {
    %c0_i32 = arith.constant 0 : i32
    %c0_i32_0 = arith.constant 0 : i32
    %c0_i32_1 = arith.constant 0 : i32
    return %c0_i32, %c0_i32_0 : i32, i32
  }
  func.func @transform_4(%arg0: i32) -> (i32, i32) {
    %c0_i32 = arith.constant 0 : i32
    %c0_i32_0 = arith.constant 0 : i32
    %c0_i32_1 = arith.constant 0 : i32
    return %c0_i32, %c0_i32_0 : i32, i32
  }
  func.func @transform_5(%arg0: i32) -> (i32, i32) {
    %c0_i32 = arith.constant 0 : i32
    %c0_i32_0 = arith.constant 0 : i32
    %c0_i32_1 = arith.constant 0 : i32
    return %c0_i32, %c0_i32_0 : i32, i32
  }
  func.func @transform_6(%arg0: i32) -> (i32, i32) {
    %c0_i32 = arith.constant 0 : i32
    %c0_i32_0 = arith.constant 0 : i32
    %c0_i32_1 = arith.constant 0 : i32
    return %c0_i32, %c0_i32_0 : i32, i32
  }
  func.func @transform_7(%arg0: i32) -> (i32, i32) {
    %c0_i32 = arith.constant 0 : i32
    %c0_i32_0 = arith.constant 0 : i32
    %c0_i32_1 = arith.constant 0 : i32
    return %c0_i32, %c0_i32_0 : i32, i32
  }
  func.func @transform_8(%arg0: i32) -> (i32, i32, i32) {
    %c0_i32 = arith.constant 0 : i32
    %c0_i32_0 = arith.constant 0 : i32
    %c0_i32_1 = arith.constant 0 : i32
    return %arg0, %c0_i32, %c0_i32_0 : i32, i32, i32
  }
}

</mosaic_0001>

<llo_original>
// kernel: tpu_custom_call.1
$region0: #{tpu_custom_call.1}
  #allocation0 [shape = 'u32[]', space=smem, size = 0x4, offset = 0x4, fixed_abs, tag = 'smem constant byte address 0x4 - core index']
  #allocation1 [shape = 'u32[144,128]{1,0:T(1,128)}', space=vmem, size = 0x12000, scoped, tag = 'internal scratch']
  #allocation2 [shape = 'f32[1,1]{1,0:T(1,128)S(1)}', space=vmem, size = 0x200, scoped, tag = 'scoped memory for tpu_custom_call.1']
  %s0 = inlined_call_operand.vmem [shape: f32[300,32], index: 0, kind: input, shape index: {}]
  %s1 = inlined_call_operand.vmem [shape: f32[300,32], index: 1, kind: input, shape index: {}]
  %s2 = inlined_call_operand.vmem [shape: f32[32,32], index: 2, kind: input, shape index: {}]
  %s3 = inlined_call_operand.vmem [shape: f32[1,32], index: 3, kind: input, shape index: {}]
  %s4 = inlined_call_operand.vmem [shape: f32[32,32], index: 4, kind: input, shape index: {}]
  %s5 = inlined_call_operand.vmem [shape: f32[1,32], index: 5, kind: input, shape index: {}]
  %s6 = inlined_call_operand.vmem [shape: f32[1,32], index: 6, kind: input, shape index: {}]
  %s7 = inlined_call_operand.<no memory space> [shape: f32[1,1], index: 7, kind: input, shape index: {}]
  %s8 = inlined_call_operand.hbm [shape: f32[1,1,300], index: 8, kind: output, shape index: {}]
  %s9 = sld [smem:[#allocation0]]
  $region42: #{tpu_custom_call.1} parent=0
    _
  %s11 = ssub.s32 1, %s9
  %s12 = scalar_select 0, %s11, %s9
  %v13 = vstv %s7
  %14 = vst [vmem:[#allocation2] sm:$0x1] %v13
  $region1: #{tpu_custom_call.1} parent=0
    #allocation3 [shape = 'u8[1536]{0}', space=vmem, size = 0x800, scoped, tag = 'output window, operand 0, single buffered']
    #allocation4 [shape = 's32[1]{0}', space=sflag, size = 0x4, scoped, tag = 'scoped memory for tpu_custom_call.1']
    %15 = vsyncpa [#allocation4], 0
    // Predicated region
    $region2: #{tpu_custom_call.1} parent=1 // pred_check
      _
    $region3: #{tpu_custom_call.1} parent=1 // pred_check_branch
      %17 = sbr.rel (0) target = $region5
    $region4: #{tpu_custom_call.1} parent=1 // pred_region
      _
    $region5: #{tpu_custom_call.1} parent=1 // pred_fallthru
      _
    // Predicated region
    $region6: #{tpu_custom_call.1} parent=1 // pred_check
      _
    $region7: #{tpu_custom_call.1} parent=1 // pred_check_branch
      %19 = sbr.rel (0) target = $region9
    $region8: #{tpu_custom_call.1} parent=1 // pred_region
      _
    $region9: #{tpu_custom_call.1} parent=1 // pred_fallthru
      _
    // Predicated region
    $region10: #{tpu_custom_call.1} parent=1 // pred_check
      _
    $region11: #{tpu_custom_call.1} parent=1 // pred_check_branch
      %21 = sbr.rel (0) target = $region13
    $region12: #{tpu_custom_call.1} parent=1 // pred_region
      _
    $region13: #{tpu_custom_call.1} parent=1 // pred_fallthru
      _
    // Predicated region
    $region14: #{tpu_custom_call.1} parent=1 // pred_check
      _
    $region15: #{tpu_custom_call.1} parent=1 // pred_check_branch
      %23 = sbr.rel (0) target = $region17
    $region16: #{tpu_custom_call.1} parent=1 // pred_region
      _
    $region17: #{tpu_custom_call.1} parent=1 // pred_fallthru
      _
    // Predicated region
    $region18: #{tpu_custom_call.1} parent=1 // pred_check
      _
    $region19: #{tpu_custom_call.1} parent=1 // pred_check_branch
      %25 = sbr.rel (0) target = $region21
    $region20: #{tpu_custom_call.1} parent=1 // pred_region
      _
    $region21: #{tpu_custom_call.1} parent=1 // pred_fallthru
      _
    // Predicated region
    $region22: #{tpu_custom_call.1} parent=1 // pred_check
      _
    $region23: #{tpu_custom_call.1} parent=1 // pred_check_branch
      %27 = sbr.rel (0) target = $region25
    $region24: #{tpu_custom_call.1} parent=1 // pred_region
      _
    $region25: #{tpu_custom_call.1} parent=1 // pred_fallthru
      _
    // Predicated region
    $region26: #{tpu_custom_call.1} parent=1 // pred_check
      _
    $region27: #{tpu_custom_call.1} parent=1 // pred_check_branch
      %29 = sbr.rel (0) target = $region29
    $region28: #{tpu_custom_call.1} parent=1 // pred_region
      _
    $region29: #{tpu_custom_call.1} parent=1 // pred_fallthru
      _
    // Predicated region
    $region30: #{tpu_custom_call.1} parent=1 // pred_check
      _
    $region31: #{tpu_custom_call.1} parent=1 // pred_check_branch
      %31 = sbr.rel (0) target = $region33
    $region32: #{tpu_custom_call.1} parent=1 // pred_region
      _
    $region33: #{tpu_custom_call.1} parent=1 // pred_fallthru
      _
    %v32 = vld [vmem:[%s0] sm:$0xff]
    %v33 = vld [vmem:[%s0 + $0x8] sm:$0xff]
    %v34 = vld [vmem:[%s0 + $0x10] sm:$0xff]
    %v35 = vld [vmem:[%s0 + $0x18] sm:$0xff]
    %v36 = vld [vmem:[%s0 + $0x20] sm:$0xff]
    %v37 = vld [vmem:[%s0 + $0x28] sm:$0xff]
    %v38 = vld [vmem:[%s0 + $0x30] sm:$0xff]
    %v39 = vld [vmem:[%s0 + $0x38] sm:$0xff]
    %v40 = vld [vmem:[%s0 + $0x40] sm:$0xff]
    %v41 = vld [vmem:[%s0 + $0x48] sm:$0xff]
    %v42 = vld [vmem:[%s0 + $0x50] sm:$0xff]
    %v43 = vld [vmem:[%s0 + $0x58] sm:$0xff]
    %v44 = vld [vmem:[%s0 + $0x60] sm:$0xff]
    %v45 = vld [vmem:[%s0 + $0x68] sm:$0xff]
    %v46 = vld [vmem:[%s0 + $0x70] sm:$0xff]
    %v47 = vld [vmem:[%s0 + $0x78] sm:$0xff]
    %v48 = vld [vmem:[%s0 + $0x80] sm:$0xff]
    %v49 = vld [vmem:[%s0 + $0x88] sm:$0xff]
    %v50 = vld [vmem:[%s0 + $0x90] sm:$0xff]
    %v51 = vld [vmem:[%s0 + $0x98] sm:$0xff]
    %v52 = vld [vmem:[%s0 + $0xa0] sm:$0xff]
    %v53 = vld [vmem:[%s0 + $0xa8] sm:$0xff]
    %v54 = vld [vmem:[%s0 + $0xb0] sm:$0xff]
    %v55 = vld [vmem:[%s0 + $0xb8] sm:$0xff]
    %v56 = vld [vmem:[%s0 + $0xc0] sm:$0xff]
    %v57 = vld [vmem:[%s0 + $0xc8] sm:$0xff]
    %v58 = vld [vmem:[%s0 + $0xd0] sm:$0xff]
    %v59 = vld [vmem:[%s0 + $0xd8] sm:$0xff]
    %v60 = vld [vmem:[%s0 + $0xe0] sm:$0xff]
    %v61 = vld [vmem:[%s0 + $0xe8] sm:$0xff]
    %v62 = vld [vmem:[%s0 + $0xf0] sm:$0xff]
    %v63 = vld [vmem:[%s0 + $0xf8] sm:$0xff]
    %v64 = vld [vmem:[%s0 + $0x100] sm:$0xff]
    %v65 = vld [vmem:[%s0 + $0x108] sm:$0xff]
    %v66 = vld [vmem:[%s0 + $0x110] sm:$0xff]
    %v67 = vld [vmem:[%s0 + $0x118] sm:$0xff]
    %v68 = vld [vmem:[%s0 + $0x120] sm:$0xff]
    %v69 = vld [vmem:[%s0 + $0x128] sm:$0xf]
    %v70 = vld [vmem:[%s1] sm:$0xff]
    %v71 = vld [vmem:[%s1 + $0x8] sm:$0xff]
    %v72 = vld [vmem:[%s1 + $0x10] sm:$0xff]
    %v73 = vld [vmem:[%s1 + $0x18] sm:$0xff]
    %v74 = vld [vmem:[%s1 + $0x20] sm:$0xff]
    %v75 = vld [vmem:[%s1 + $0x28] sm:$0xff]
    %v76 = vld [vmem:[%s1 + $0x30] sm:$0xff]
    %v77 = vld [vmem:[%s1 + $0x38] sm:$0xff]
    %v78 = vld [vmem:[%s1 + $0x40] sm:$0xff]
    %v79 = vld [vmem:[%s1 + $0x48] sm:$0xff]
    %v80 = vld [vmem:[%s1 + $0x50] sm:$0xff]
    %v81 = vld [vmem:[%s1 + $0x58] sm:$0xff]
    %v82 = vld [vmem:[%s1 + $0x60] sm:$0xff]
    %v83 = vld [vmem:[%s1 + $0x68] sm:$0xff]
    %v84 = vld [vmem:[%s1 + $0x70] sm:$0xff]
    %v85 = vld [vmem:[%s1 + $0x78] sm:$0xff]
    %v86 = vld [vmem:[%s1 + $0x80] sm:$0xff]
    %v87 = vld [vmem:[%s1 + $0x88] sm:$0xff]
    %v88 = vld [vmem:[%s1 + $0x90] sm:$0xff]
    %v89 = vld [vmem:[%s1 + $0x98] sm:$0xff]
    %v90 = vld [vmem:[%s1 + $0xa0] sm:$0xff]
    %v91 = vld [vmem:[%s1 + $0xa8] sm:$0xff]
    %v92 = vld [vmem:[%s1 + $0xb0] sm:$0xff]
    %v93 = vld [vmem:[%s1 + $0xb8] sm:$0xff]
    %v94 = vld [vmem:[%s1 + $0xc0] sm:$0xff]
    %v95 = vld [vmem:[%s1 + $0xc8] sm:$0xff]
    %v96 = vld [vmem:[%s1 + $0xd0] sm:$0xff]
    %v97 = vld [vmem:[%s1 + $0xd8] sm:$0xff]
    %v98 = vld [vmem:[%s1 + $0xe0] sm:$0xff]
    %v99 = vld [vmem:[%s1 + $0xe8] sm:$0xff]
    %v100 = vld [vmem:[%s1 + $0xf0] sm:$0xff]
    %v101 = vld [vmem:[%s1 + $0xf8] sm:$0xff]
    %v102 = vld [vmem:[%s1 + $0x100] sm:$0xff]
    %v103 = vld [vmem:[%s1 + $0x108] sm:$0xff]
    %v104 = vld [vmem:[%s1 + $0x110] sm:$0xff]
    %v105 = vld [vmem:[%s1 + $0x118] sm:$0xff]
    %v106 = vld [vmem:[%s1 + $0x120] sm:$0xff]
    %v107 = vld [vmem:[%s1 + $0x128] sm:$0xf]
    %v108 = vmul.f32 %v32, %v70
    %v109 = vmul.f32 %v33, %v71
    %v110 = vmul.f32 %v34, %v72
    %v111 = vmul.f32 %v35, %v73
    %v112 = vmul.f32 %v36, %v74
    %v113 = vmul.f32 %v37, %v75
    %v114 = vmul.f32 %v38, %v76
    %v115 = vmul.f32 %v39, %v77
    %v116 = vmul.f32 %v40, %v78
    %v117 = vmul.f32 %v41, %v79
    %v118 = vmul.f32 %v42, %v80
    %v119 = vmul.f32 %v43, %v81
    %v120 = vmul.f32 %v44, %v82
    %v121 = vmul.f32 %v45, %v83
    %v122 = vmul.f32 %v46, %v84
    %v123 = vmul.f32 %v47, %v85
    %v124 = vmul.f32 %v48, %v86
    %v125 = vmul.f32 %v49, %v87
    %v126 = vmul.f32 %v50, %v88
    %v127 = vmul.f32 %v51, %v89
    %v128 = vmul.f32 %v52, %v90
    %v129 = vmul.f32 %v53, %v91
    %v130 = vmul.f32 %v54, %v92
    %v131 = vmul.f32 %v55, %v93
    %v132 = vmul.f32 %v56, %v94
    %v133 = vmul.f32 %v57, %v95
    %v134 = vmul.f32 %v58, %v96
    %v135 = vmul.f32 %v59, %v97
    %v136 = vmul.f32 %v60, %v98
    %v137 = vmul.f32 %v61, %v99
    %v138 = vmul.f32 %v62, %v100
    %v139 = vmul.f32 %v63, %v101
    %v140 = vmul.f32 %v64, %v102
    %v141 = vmul.f32 %v65, %v103
    %v142 = vmul.f32 %v66, %v104
    %v143 = vmul.f32 %v67, %v105
    %v144 = vmul.f32 %v68, %v106
    %v145 = vmul.f32 %v69, %v107
    %v146 = vld [vmem:[%s2] sm:$0xff]
    %v147 = vld [vmem:[%s2 + $0x8] sm:$0xff]
    %v148 = vld [vmem:[%s2 + $0x10] sm:$0xff]
    %v149 = vld [vmem:[%s2 + $0x18] sm:$0xff]
    %v150 = vld [vmem:[%s3] sm:$0x1]
    %v152 = vlaneseq
    %v153 = vshrl.u32 %v152, 7
    %v154 = vsub.s32 0, %v153
    %v155 = vrot.slane %v150, %v154
    %vm157 = vcmask 261120
    %v159 = vsel %vm157, %v108, 0
    %v162 = vsel %vm157, %v109, 0
    %v165 = vsel %vm157, %v110, 0
    %v168 = vsel %vm157, %v111, 0
    %v171 = vsel %vm157, %v112, 0
    %v174 = vsel %vm157, %v113, 0
    %v177 = vsel %vm157, %v114, 0
    %v180 = vsel %vm157, %v115, 0
    %v183 = vsel %vm157, %v116, 0
    %v186 = vsel %vm157, %v117, 0
    %v189 = vsel %vm157, %v118, 0
    %v192 = vsel %vm157, %v119, 0
    %v195 = vsel %vm157, %v120, 0
    %v198 = vsel %vm157, %v121, 0
    %v201 = vsel %vm157, %v122, 0
    %v204 = vsel %vm157, %v123, 0
    %v207 = vsel %vm157, %v124, 0
    %v210 = vsel %vm157, %v125, 0
    %v213 = vsel %vm157, %v126, 0
    %v216 = vsel %vm157, %v127, 0
    %v219 = vsel %vm157, %v128, 0
    %v222 = vsel %vm157, %v129, 0
    %v225 = vsel %vm157, %v130, 0
    %v228 = vsel %vm157, %v131, 0
    %v231 = vsel %vm157, %v132, 0
    %v234 = vsel %vm157, %v133, 0
    %v237 = vsel %vm157, %v134, 0
    %v240 = vsel %vm157, %v135, 0
    %v243 = vsel %vm157, %v136, 0
    %v246 = vsel %vm157, %v137, 0
    %v249 = vsel %vm157, %v138, 0
    %v252 = vsel %vm157, %v139, 0
    %v255 = vsel %vm157, %v140, 0
    %v258 = vsel %vm157, %v141, 0
    %v261 = vsel %vm157, %v142, 0
    %v264 = vsel %vm157, %v143, 0
    %v267 = vsel %vm157, %v144, 0
    %v270 = vsel %vm157, %v145, 0
    %272 = vmatprep.subr.mxu0 0.0
    %273 = vmatpush1.msra.mxu0 0.0
    %274 = vmatprep.subr.mxu0 0.0
    %275 = vmatpush1.msra.mxu0 0.0
    %276 = vmatprep.subr.mxu0 0.0
    %277 = vmatpush1.msra.mxu0 0.0
    %278 = vmatprep.subr.mxu0 0.0
    %279 = vmatpush1.msra.mxu0 0.0
    %280 = vmatprep.subr.mxu0 0.0
    %281 = vmatpush1.msra.mxu0 0.0
    %282 = vmatprep.subr.mxu0 0.0
    %283 = vmatpush1.msra.mxu0 0.0
    %284 = vmatprep.subr.mxu0 0.0
    %285 = vmatpush1.msra.mxu0 0.0
    %286 = vmatprep.subr.mxu0 0.0
    %287 = vmatpush1.msra.mxu0 0.0
    %288 = vmatprep.subr.mxu0 0.0
    %289 = vmatpush1.msra.mxu0 0.0
    %290 = vmatprep.subr.mxu0 0.0
    %291 = vmatpush1.msra.mxu0 0.0
    %292 = vmatprep.subr.mxu0 0.0
    %293 = vmatpush1.msra.mxu0 0.0
    %294 = vmatprep.subr.mxu0 0.0
    %295 = vmatpush1.msra.mxu0 0.0
    %296 = vmatprep.subr.mxu0 0.0
    %297 = vmatpush1.msra.mxu0 %v149
    %298 = vmatprep.subr.mxu0 0.0
    %299 = vmatpush1.msra.mxu0 %v148
    %300 = vmatprep.subr.mxu0 0.0
    %301 = vmatpush1.msra.mxu0 %v147
    %302 = vmatprep.subr.mxu0 0.0
    %303 = vmatpush1.msra.mxu0 %v146
    %304 = vmatprep.subr.mxu0 0.0
    %305 = vmatpush2.msra.mxu0 0.0
    %306 = vmatprep.subr.mxu0 0.0
    %307 = vmatpush2.msra.mxu0 0.0
    %308 = vmatprep.subr.mxu0 0.0
    %309 = vmatpush2.msra.mxu0 0.0
    %310 = vmatprep.subr.mxu0 0.0
    %311 = vmatpush2.msra.mxu0 0.0
    %312 = vmatprep.subr.mxu0 0.0
    %313 = vmatpush2.msra.mxu0 0.0
    %314 = vmatprep.subr.mxu0 0.0
    %315 = vmatpush2.msra.mxu0 0.0
    %316 = vmatprep.subr.mxu0 0.0
    %317 = vmatpush2.msra.mxu0 0.0
    %318 = vmatprep.subr.mxu0 0.0
    %319 = vmatpush2.msra.mxu0 0.0
    %320 = vmatprep.subr.mxu0 0.0
    %321 = vmatpush2.msra.mxu0 0.0
    %322 = vmatprep.subr.mxu0 0.0
    %323 = vmatpush2.msra.mxu0 0.0
    %324 = vmatprep.subr.mxu0 0.0
    %325 = vmatpush2.msra.mxu0 0.0
    %326 = vmatprep.subr.mxu0 0.0
    %327 = vmatpush2.msra.mxu0 0.0
    %328 = vmatprep.subr.mxu0 0.0
    %329 = vmatpush2.msra.mxu0 0.0
    %330 = vmatprep.subr.mxu0 0.0
    %331 = vmatpush2.msra.mxu0 0.0
    %332 = vmatprep.subr.mxu0 0.0
    %333 = vmatpush2.msra.mxu0 0.0
    %334 = vmatprep.subr.mxu0 0.0
    %335 = vmatpush2.msra.mxu0 0.0
    %336 = vmatprep.mubr.f32.mxu0 0.0
    %337 = vmatmul.mubr.f32.gmra.mxu0 %v159
    %v338 = vpop.f32.mrf.mxu0
    %v339 = vadd.f32 %v155, %v338
    %v340 = vpop.f32.mrf.mxu0
    %341 = vmatprep.mubr.f32.mxu0 0.0
    %342 = vmatmul.mubr.f32.gmra.mxu0 %v162
    %v343 = vpop.f32.mrf.mxu0
    %v344 = vadd.f32 %v155, %v343
    %v345 = vpop.f32.mrf.mxu0
    %346 = vmatprep.mubr.f32.mxu0 0.0
    %347 = vmatmul.mubr.f32.gmra.mxu0 %v165
    %v348 = vpop.f32.mrf.mxu0
    %v349 = vadd.f32 %v155, %v348
    %v350 = vpop.f32.mrf.mxu0
    %351 = vmatprep.mubr.f32.mxu0 0.0
    %352 = vmatmul.mubr.f32.gmra.mxu0 %v168
    %v353 = vpop.f32.mrf.mxu0
    %v354 = vadd.f32 %v155, %v353
    %v355 = vpop.f32.mrf.mxu0
    %356 = vmatprep.mubr.f32.mxu0 0.0
    %357 = vmatmul.mubr.f32.gmra.mxu0 %v171
    %v358 = vpop.f32.mrf.mxu0
    %v359 = vadd.f32 %v155, %v358
    %v360 = vpop.f32.mrf.mxu0
    %361 = vmatprep.mubr.f32.mxu0 0.0
    %362 = vmatmul.mubr.f32.gmra.mxu0 %v174
    %v363 = vpop.f32.mrf.mxu0
    %v364 = vadd.f32 %v155, %v363
    %v365 = vpop.f32.mrf.mxu0
    %366 = vmatprep.mubr.f32.mxu0 0.0
    %367 = vmatmul.mubr.f32.gmra.mxu0 %v177
    %v368 = vpop.f32.mrf.mxu0
    %v369 = vadd.f32 %v155, %v368
    %v370 = vpop.f32.mrf.mxu0
    %371 = vmatprep.mubr.f32.mxu0 0.0
    %372 = vmatmul.mubr.f32.gmra.mxu0 %v180
    %v373 = vpop.f32.mrf.mxu0
    %v374 = vadd.f32 %v155, %v373
    %v375 = vpop.f32.mrf.mxu0
    %376 = vmatprep.mubr.f32.mxu0 0.0
    %377 = vmatmul.mubr.f32.gmra.mxu0 %v183
    %v378 = vpop.f32.mrf.mxu0
    %v379 = vadd.f32 %v155, %v378
    %v380 = vpop.f32.mrf.mxu0
    %381 = vmatprep.mubr.f32.mxu0 0.0
    %382 = vmatmul.mubr.f32.gmra.mxu0 %v186
    %v383 = vpop.f32.mrf.mxu0
    %v384 = vadd.f32 %v155, %v383
    %v385 = vpop.f32.mrf.mxu0
    %386 = vmatprep.mubr.f32.mxu0 0.0
    %387 = vmatmul.mubr.f32.gmra.mxu0 %v189
    %v388 = vpop.f32.mrf.mxu0
    %v389 = vadd.f32 %v155, %v388
    %v390 = vpop.f32.mrf.mxu0
    %391 = vmatprep.mubr.f32.mxu0 0.0
    %392 = vmatmul.mubr.f32.gmra.mxu0 %v192
    %v393 = vpop.f32.mrf.mxu0
    %v394 = vadd.f32 %v155, %v393
    %v395 = vpop.f32.mrf.mxu0
    %396 = vmatprep.mubr.f32.mxu0 0.0
    %397 = vmatmul.mubr.f32.gmra.mxu0 %v195
    %v398 = vpop.f32.mrf.mxu0
    %v399 = vadd.f32 %v155, %v398
    %v400 = vpop.f32.mrf.mxu0
    %401 = vmatprep.mubr.f32.mxu0 0.0
    %402 = vmatmul.mubr.f32.gmra.mxu0 %v198
    %v403 = vpop.f32.mrf.mxu0
    %v404 = vadd.f32 %v155, %v403
    %v405 = vpop.f32.mrf.mxu0
    %406 = vmatprep.mubr.f32.mxu0 0.0
    %407 = vmatmul.mubr.f32.gmra.mxu0 %v201
    %v408 = vpop.f32.mrf.mxu0
    %v409 = vadd.f32 %v155, %v408
    %v410 = vpop.f32.mrf.mxu0
    %411 = vmatprep.mubr.f32.mxu0 0.0
    %412 = vmatmul.mubr.f32.gmra.mxu0 %v204
    %v413 = vpop.f32.mrf.mxu0
    %v414 = vadd.f32 %v155, %v413
    %v415 = vpop.f32.mrf.mxu0
    %416 = vmatprep.mubr.f32.mxu0 0.0
    %417 = vmatmul.mubr.f32.gmra.mxu0 %v207
    %v418 = vpop.f32.mrf.mxu0
    %v419 = vadd.f32 %v155, %v418
    %v420 = vpop.f32.mrf.mxu0
    %421 = vmatprep.mubr.f32.mxu0 0.0
    %422 = vmatmul.mubr.f32.gmra.mxu0 %v210
    %v423 = vpop.f32.mrf.mxu0
    %v424 = vadd.f32 %v155, %v423
    %v425 = vpop.f32.mrf.mxu0
    %426 = vmatprep.mubr.f32.mxu0 0.0
    %427 = vmatmul.mubr.f32.gmra.mxu0 %v213
    %v428 = vpop.f32.mrf.mxu0
    %v429 = vadd.f32 %v155, %v428
    %v430 = vpop.f32.mrf.mxu0
    %431 = vmatprep.mubr.f32.mxu0 0.0
    %432 = vmatmul.mubr.f32.gmra.mxu0 %v216
    %v433 = vpop.f32.mrf.mxu0
    %v434 = vadd.f32 %v155, %v433
    %v435 = vpop.f32.mrf.mxu0
    %436 = vmatprep.mubr.f32.mxu0 0.0
    %437 = vmatmul.mubr.f32.gmra.mxu0 %v219
    %v438 = vpop.f32.mrf.mxu0
    %v439 = vadd.f32 %v155, %v438
    %v440 = vpop.f32.mrf.mxu0
    %441 = vmatprep.mubr.f32.mxu0 0.0
    %442 = vmatmul.mubr.f32.gmra.mxu0 %v222
    %v443 = vpop.f32.mrf.mxu0
    %v444 = vadd.f32 %v155, %v443
    %v445 = vpop.f32.mrf.mxu0
    %446 = vmatprep.mubr.f32.mxu0 0.0
    %447 = vmatmul.mubr.f32.gmra.mxu0 %v225
    %v448 = vpop.f32.mrf.mxu0
    %v449 = vadd.f32 %v155, %v448
    %v450 = vpop.f32.mrf.mxu0
    %451 = vmatprep.mubr.f32.mxu0 0.0
    %452 = vmatmul.mubr.f32.gmra.mxu0 %v228
    %v453 = vpop.f32.mrf.mxu0
    %v454 = vadd.f32 %v155, %v453
    %v455 = vpop.f32.mrf.mxu0
    %456 = vmatprep.mubr.f32.mxu0 0.0
    %457 = vmatmul.mubr.f32.gmra.mxu0 %v231
    %v458 = vpop.f32.mrf.mxu0
    %v459 = vadd.f32 %v155, %v458
    %v460 = vpop.f32.mrf.mxu0
    %461 = vmatprep.mubr.f32.mxu0 0.0
    %462 = vmatmul.mubr.f32.gmra.mxu0 %v234
    %v463 = vpop.f32.mrf.mxu0
    %v464 = vadd.f32 %v155, %v463
    %v465 = vpop.f32.mrf.mxu0
    %466 = vmatprep.mubr.f32.mxu0 0.0
    %467 = vmatmul.mubr.f32.gmra.mxu0 %v237
    %v468 = vpop.f32.mrf.mxu0
    %v469 = vadd.f32 %v155, %v468
    %v470 = vpop.f32.mrf.mxu0
    %471 = vmatprep.mubr.f32.mxu0 0.0
    %472 = vmatmul.mubr.f32.gmra.mxu0 %v240
    %v473 = vpop.f32.mrf.mxu0
    %v474 = vadd.f32 %v155, %v473
    %v475 = vpop.f32.mrf.mxu0
    %476 = vmatprep.mubr.f32.mxu0 0.0
    %477 = vmatmul.mubr.f32.gmra.mxu0 %v243
    %v478 = vpop.f32.mrf.mxu0
    %v479 = vadd.f32 %v155, %v478
    %v480 = vpop.f32.mrf.mxu0
    %481 = vmatprep.mubr.f32.mxu0 0.0
    %482 = vmatmul.mubr.f32.gmra.mxu0 %v246
    %v483 = vpop.f32.mrf.mxu0
    %v484 = vadd.f32 %v155, %v483
    %v485 = vpop.f32.mrf.mxu0
    %486 = vmatprep.mubr.f32.mxu0 0.0
    %487 = vmatmul.mubr.f32.gmra.mxu0 %v249
    %v488 = vpop.f32.mrf.mxu0
    %v489 = vadd.f32 %v155, %v488
    %v490 = vpop.f32.mrf.mxu0
    %491 = vmatprep.mubr.f32.mxu0 0.0
    %492 = vmatmul.mubr.f32.gmra.mxu0 %v252
    %v493 = vpop.f32.mrf.mxu0
    %v494 = vadd.f32 %v155, %v493
    %v495 = vpop.f32.mrf.mxu0
    %496 = vmatprep.mubr.f32.mxu0 0.0
    %497 = vmatmul.mubr.f32.gmra.mxu0 %v255
    %v498 = vpop.f32.mrf.mxu0
    %v499 = vadd.f32 %v155, %v498
    %v500 = vpop.f32.mrf.mxu0
    %501 = vmatprep.mubr.f32.mxu0 0.0
    %502 = vmatmul.mubr.f32.gmra.mxu0 %v258
    %v503 = vpop.f32.mrf.mxu0
    %v504 = vadd.f32 %v155, %v503
    %v505 = vpop.f32.mrf.mxu0
    %506 = vmatprep.mubr.f32.mxu0 0.0
    %507 = vmatmul.mubr.f32.gmra.mxu0 %v261
    %v508 = vpop.f32.mrf.mxu0
    %v509 = vadd.f32 %v155, %v508
    %v510 = vpop.f32.mrf.mxu0
    %511 = vmatprep.mubr.f32.mxu0 0.0
    %512 = vmatmul.mubr.f32.gmra.mxu0 %v264
    %v513 = vpop.f32.mrf.mxu0
    %v514 = vadd.f32 %v155, %v513
    %v515 = vpop.f32.mrf.mxu0
    %516 = vmatprep.mubr.f32.mxu0 0.0
    %517 = vmatmul.mubr.f32.gmra.mxu0 %v267
    %v518 = vpop.f32.mrf.mxu0
    %v519 = vadd.f32 %v155, %v518
    %v520 = vpop.f32.mrf.mxu0
    %521 = vmatprep.mubr.f32.mxu0 0.0
    %522 = vmatmul.mubr.f32.gmra.mxu0 %v270
    %v523 = vpop.f32.mrf.mxu0
    %v524 = vadd.f32 %v155, %v523
    %v525 = vpop.f32.mrf.mxu0
    %526 = vdwg.mxu0
    %v527 = vmax.f32 %v339, 0.0
    %v528 = vmax.f32 %v344, 0.0
    %v529 = vmax.f32 %v349, 0.0
    %v530 = vmax.f32 %v354, 0.0
    %v531 = vmax.f32 %v359, 0.0
    %v532 = vmax.f32 %v364, 0.0
    %v533 = vmax.f32 %v369, 0.0
    %v534 = vmax.f32 %v374, 0.0
    %v535 = vmax.f32 %v379, 0.0
    %v536 = vmax.f32 %v384, 0.0
    %v537 = vmax.f32 %v389, 0.0
    %v538 = vmax.f32 %v394, 0.0
    %v539 = vmax.f32 %v399, 0.0
    %v540 = vmax.f32 %v404, 0.0
    %v541 = vmax.f32 %v409, 0.0
    %v542 = vmax.f32 %v414, 0.0
    %v543 = vmax.f32 %v419, 0.0
    %v544 = vmax.f32 %v424, 0.0
    %v545 = vmax.f32 %v429, 0.0
    %v546 = vmax.f32 %v434, 0.0
    %v547 = vmax.f32 %v439, 0.0
    %v548 = vmax.f32 %v444, 0.0
    %v549 = vmax.f32 %v449, 0.0
    %v550 = vmax.f32 %v454, 0.0
    %v551 = vmax.f32 %v459, 0.0
    %v552 = vmax.f32 %v464, 0.0
    %v553 = vmax.f32 %v469, 0.0
    %v554 = vmax.f32 %v474, 0.0
    %v555 = vmax.f32 %v479, 0.0
    %v556 = vmax.f32 %v484, 0.0
    %v557 = vmax.f32 %v489, 0.0
    %v558 = vmax.f32 %v494, 0.0
    %v559 = vmax.f32 %v499, 0.0
    %v560 = vmax.f32 %v504, 0.0
    %v561 = vmax.f32 %v509, 0.0
    %v562 = vmax.f32 %v514, 0.0
    %v563 = vmax.f32 %v519, 0.0
    %v564 = vmax.f32 %v524, 0.0
    %v565 = vld [vmem:[%s4] sm:$0xff]
    %v566 = vld [vmem:[%s4 + $0x8] sm:$0xff]
    %v567 = vld [vmem:[%s4 + $0x10] sm:$0xff]
    %v568 = vld [vmem:[%s4 + $0x18] sm:$0xff]
    %v569 = vld [vmem:[%s5] sm:$0x1]
    %v571 = vlaneseq
    %v572 = vshrl.u32 %v571, 7
    %v573 = vsub.s32 0, %v572
    %v574 = vrot.slane %v569, %v573
    %v577 = vsel %vm157, %v527, 0
    %v580 = vsel %vm157, %v528, 0
    %v583 = vsel %vm157, %v529, 0
    %v586 = vsel %vm157, %v530, 0
    %v589 = vsel %vm157, %v531, 0
    %v592 = vsel %vm157, %v532, 0
    %v595 = vsel %vm157, %v533, 0
    %v598 = vsel %vm157, %v534, 0
    %v601 = vsel %vm157, %v535, 0
    %v604 = vsel %vm157, %v536, 0
    %v607 = vsel %vm157, %v537, 0
    %v610 = vsel %vm157, %v538, 0
    %v613 = vsel %vm157, %v539, 0
    %v616 = vsel %vm157, %v540, 0
    %v619 = vsel %vm157, %v541, 0
    %v622 = vsel %vm157, %v542, 0
    %v625 = vsel %vm157, %v543, 0
    %v628 = vsel %vm157, %v544, 0
    %v631 = vsel %vm157, %v545, 0
    %v634 = vsel %vm157, %v546, 0
    %v637 = vsel %vm157, %v547, 0
    %v640 = vsel %vm157, %v548, 0
    %v643 = vsel %vm157, %v549, 0
    %v646 = vsel %vm157, %v550, 0
    %v649 = vsel %vm157, %v551, 0
    %v652 = vsel %vm157, %v552, 0
    %v655 = vsel %vm157, %v553, 0
    %v658 = vsel %vm157, %v554, 0
    %v661 = vsel %vm157, %v555, 0
    %v664 = vsel %vm157, %v556, 0
    %v667 = vsel %vm157, %v557, 0
    %v670 = vsel %vm157, %v558, 0
    %v673 = vsel %vm157, %v559, 0
    %v676 = vsel %vm157, %v560, 0
    %v679 = vsel %vm157, %v561, 0
    %v682 = vsel %vm157, %v562, 0
    %v685 = vsel %vm157, %v563, 0
    %v688 = vsel %vm157, %v564, 0
    %690 = vmatprep.subr.mxu0 0.0
    %691 = vmatpush1.msra.mxu0 0.0
    %692 = vmatprep.subr.mxu0 0.0
    %693 = vmatpush1.msra.mxu0 0.0
    %694 = vmatprep.subr.mxu0 0.0
    %695 = vmatpush1.msra.mxu0 0.0
    %696 = vmatprep.subr.mxu0 0.0
    %697 = vmatpush1.msra.mxu0 0.0
    %698 = vmatprep.subr.mxu0 0.0
    %699 = vmatpush1.msra.mxu0 0.0
    %700 = vmatprep.subr.mxu0 0.0
    %701 = vmatpush1.msra.mxu0 0.0
    %702 = vmatprep.subr.mxu0 0.0
    %703 = vmatpush1.msra.mxu0 0.0
    %704 = vmatprep.subr.mxu0 0.0
    %705 = vmatpush1.msra.mxu0 0.0
    %706 = vmatprep.subr.mxu0 0.0
    %707 = vmatpush1.msra.mxu0 0.0
    %708 = vmatprep.subr.mxu0 0.0
    %709 = vmatpush1.msra.mxu0 0.0
    %710 = vmatprep.subr.mxu0 0.0
    %711 = vmatpush1.msra.mxu0 0.0
    %712 = vmatprep.subr.mxu0 0.0
    %713 = vmatpush1.msra.mxu0 0.0
    %714 = vmatprep.subr.mxu0 0.0
    %715 = vmatpush1.msra.mxu0 %v568
    %716 = vmatprep.subr.mxu0 0.0
    %717 = vmatpush1.msra.mxu0 %v567
    %718 = vmatprep.subr.mxu0 0.0
    %719 = vmatpush1.msra.mxu0 %v566
    %720 = vmatprep.subr.mxu0 0.0
    %721 = vmatpush1.msra.mxu0 %v565
    %722 = vmatprep.subr.mxu0 0.0
    %723 = vmatpush2.msra.mxu0 0.0
    %724 = vmatprep.subr.mxu0 0.0
    %725 = vmatpush2.msra.mxu0 0.0
    %726 = vmatprep.subr.mxu0 0.0
    %727 = vmatpush2.msra.mxu0 0.0
    %728 = vmatprep.subr.mxu0 0.0
    %729 = vmatpush2.msra.mxu0 0.0
    %730 = vmatprep.subr.mxu0 0.0
    %731 = vmatpush2.msra.mxu0 0.0
    %732 = vmatprep.subr.mxu0 0.0
    %733 = vmatpush2.msra.mxu0 0.0
    %734 = vmatprep.subr.mxu0 0.0
    %735 = vmatpush2.msra.mxu0 0.0
    %736 = vmatprep.subr.mxu0 0.0
    %737 = vmatpush2.msra.mxu0 0.0
    %738 = vmatprep.subr.mxu0 0.0
    %739 = vmatpush2.msra.mxu0 0.0
    %740 = vmatprep.subr.mxu0 0.0
    %741 = vmatpush2.msra.mxu0 0.0
    %742 = vmatprep.subr.mxu0 0.0
    %743 = vmatpush2.msra.mxu0 0.0
    %744 = vmatprep.subr.mxu0 0.0
    %745 = vmatpush2.msra.mxu0 0.0
    %746 = vmatprep.subr.mxu0 0.0
    %747 = vmatpush2.msra.mxu0 0.0
    %748 = vmatprep.subr.mxu0 0.0
    %749 = vmatpush2.msra.mxu0 0.0
    %750 = vmatprep.subr.mxu0 0.0
    %751 = vmatpush2.msra.mxu0 0.0
    %752 = vmatprep.subr.mxu0 0.0
    %753 = vmatpush2.msra.mxu0 0.0
    %754 = vmatprep.mubr.f32.mxu0 0.0
    %755 = vmatmul.mubr.f32.gmra.mxu0 %v577
    %v756 = vpop.f32.mrf.mxu0
    %v757 = vadd.f32 %v574, %v756
    %v758 = vpop.f32.mrf.mxu0
    %759 = vmatprep.mubr.f32.mxu0 0.0
    %760 = vmatmul.mubr.f32.gmra.mxu0 %v580
    %v761 = vpop.f32.mrf.mxu0
    %v762 = vadd.f32 %v574, %v761
    %v763 = vpop.f32.mrf.mxu0
    %764 = vmatprep.mubr.f32.mxu0 0.0
    %765 = vmatmul.mubr.f32.gmra.mxu0 %v583
    %v766 = vpop.f32.mrf.mxu0
    %v767 = vadd.f32 %v574, %v766
    %v768 = vpop.f32.mrf.mxu0
    %769 = vmatprep.mubr.f32.mxu0 0.0
    %770 = vmatmul.mubr.f32.gmra.mxu0 %v586
    %v771 = vpop.f32.mrf.mxu0
    %v772 = vadd.f32 %v574, %v771
    %v773 = vpop.f32.mrf.mxu0
    %774 = vmatprep.mubr.f32.mxu0 0.0
    %775 = vmatmul.mubr.f32.gmra.mxu0 %v589
    %v776 = vpop.f32.mrf.mxu0
    %v777 = vadd.f32 %v574, %v776
    %v778 = vpop.f32.mrf.mxu0
    %779 = vmatprep.mubr.f32.mxu0 0.0
    %780 = vmatmul.mubr.f32.gmra.mxu0 %v592
    %v781 = vpop.f32.mrf.mxu0
    %v782 = vadd.f32 %v574, %v781
    %v783 = vpop.f32.mrf.mxu0
    %784 = vmatprep.mubr.f32.mxu0 0.0
    %785 = vmatmul.mubr.f32.gmra.mxu0 %v595
    %v786 = vpop.f32.mrf.mxu0
    %v787 = vadd.f32 %v574, %v786
    %v788 = vpop.f32.mrf.mxu0
    %789 = vmatprep.mubr.f32.mxu0 0.0
    %790 = vmatmul.mubr.f32.gmra.mxu0 %v598
    %v791 = vpop.f32.mrf.mxu0
    %v792 = vadd.f32 %v574, %v791
    %v793 = vpop.f32.mrf.mxu0
    %794 = vmatprep.mubr.f32.mxu0 0.0
    %795 = vmatmul.mubr.f32.gmra.mxu0 %v601
    %v796 = vpop.f32.mrf.mxu0
    %v797 = vadd.f32 %v574, %v796
    %v798 = vpop.f32.mrf.mxu0
    %799 = vmatprep.mubr.f32.mxu0 0.0
    %800 = vmatmul.mubr.f32.gmra.mxu0 %v604
    %v801 = vpop.f32.mrf.mxu0
    %v802 = vadd.f32 %v574, %v801
    %v803 = vpop.f32.mrf.mxu0
    %804 = vmatprep.mubr.f32.mxu0 0.0
    %805 = vmatmul.mubr.f32.gmra.mxu0 %v607
    %v806 = vpop.f32.mrf.mxu0
    %v807 = vadd.f32 %v574, %v806
    %v808 = vpop.f32.mrf.mxu0
    %809 = vmatprep.mubr.f32.mxu0 0.0
    %810 = vmatmul.mubr.f32.gmra.mxu0 %v610
    %v811 = vpop.f32.mrf.mxu0
    %v812 = vadd.f32 %v574, %v811
    %v813 = vpop.f32.mrf.mxu0
    %814 = vmatprep.mubr.f32.mxu0 0.0
    %815 = vmatmul.mubr.f32.gmra.mxu0 %v613
    %v816 = vpop.f32.mrf.mxu0
    %v817 = vadd.f32 %v574, %v816
    %v818 = vpop.f32.mrf.mxu0
    %819 = vmatprep.mubr.f32.mxu0 0.0
    %820 = vmatmul.mubr.f32.gmra.mxu0 %v616
    %v821 = vpop.f32.mrf.mxu0
    %v822 = vadd.f32 %v574, %v821
    %v823 = vpop.f32.mrf.mxu0
    %824 = vmatprep.mubr.f32.mxu0 0.0
    %825 = vmatmul.mubr.f32.gmra.mxu0 %v619
    %v826 = vpop.f32.mrf.mxu0
    %v827 = vadd.f32 %v574, %v826
    %v828 = vpop.f32.mrf.mxu0
    %829 = vmatprep.mubr.f32.mxu0 0.0
    %830 = vmatmul.mubr.f32.gmra.mxu0 %v622
    %v831 = vpop.f32.mrf.mxu0
    %v832 = vadd.f32 %v574, %v831
    %v833 = vpop.f32.mrf.mxu0
    %834 = vmatprep.mubr.f32.mxu0 0.0
    %835 = vmatmul.mubr.f32.gmra.mxu0 %v625
    %v836 = vpop.f32.mrf.mxu0
    %v837 = vadd.f32 %v574, %v836
    %v838 = vpop.f32.mrf.mxu0
    %839 = vmatprep.mubr.f32.mxu0 0.0
    %840 = vmatmul.mubr.f32.gmra.mxu0 %v628
    %v841 = vpop.f32.mrf.mxu0
    %v842 = vadd.f32 %v574, %v841
    %v843 = vpop.f32.mrf.mxu0
    %844 = vmatprep.mubr.f32.mxu0 0.0
    %845 = vmatmul.mubr.f32.gmra.mxu0 %v631
    %v846 = vpop.f32.mrf.mxu0
    %v847 = vadd.f32 %v574, %v846
    %v848 = vpop.f32.mrf.mxu0
    %849 = vmatprep.mubr.f32.mxu0 0.0
    %850 = vmatmul.mubr.f32.gmra.mxu0 %v634
    %v851 = vpop.f32.mrf.mxu0
    %v852 = vadd.f32 %v574, %v851
    %v853 = vpop.f32.mrf.mxu0
    %854 = vmatprep.mubr.f32.mxu0 0.0
    %855 = vmatmul.mubr.f32.gmra.mxu0 %v637
    %v856 = vpop.f32.mrf.mxu0
    %v857 = vadd.f32 %v574, %v856
    %v858 = vpop.f32.mrf.mxu0
    %859 = vmatprep.mubr.f32.mxu0 0.0
    %860 = vmatmul.mubr.f32.gmra.mxu0 %v640
    %v861 = vpop.f32.mrf.mxu0
    %v862 = vadd.f32 %v574, %v861
    %v863 = vpop.f32.mrf.mxu0
    %864 = vmatprep.mubr.f32.mxu0 0.0
    %865 = vmatmul.mubr.f32.gmra.mxu0 %v643
    %v866 = vpop.f32.mrf.mxu0
    %v867 = vadd.f32 %v574, %v866
    %v868 = vpop.f32.mrf.mxu0
    %869 = vmatprep.mubr.f32.mxu0 0.0
    %870 = vmatmul.mubr.f32.gmra.mxu0 %v646
    %v871 = vpop.f32.mrf.mxu0
    %v872 = vadd.f32 %v574, %v871
    %v873 = vpop.f32.mrf.mxu0
    %874 = vmatprep.mubr.f32.mxu0 0.0
    %875 = vmatmul.mubr.f32.gmra.mxu0 %v649
    %v876 = vpop.f32.mrf.mxu0
    %v877 = vadd.f32 %v574, %v876
    %v878 = vpop.f32.mrf.mxu0
    %879 = vmatprep.mubr.f32.mxu0 0.0
    %880 = vmatmul.mubr.f32.gmra.mxu0 %v652
    %v881 = vpop.f32.mrf.mxu0
    %v882 = vadd.f32 %v574, %v881
    %v883 = vpop.f32.mrf.mxu0
    %884 = vmatprep.mubr.f32.mxu0 0.0
    %885 = vmatmul.mubr.f32.gmra.mxu0 %v655
    %v886 = vpop.f32.mrf.mxu0
    %v887 = vadd.f32 %v574, %v886
    %v888 = vpop.f32.mrf.mxu0
    %889 = vmatprep.mubr.f32.mxu0 0.0
    %890 = vmatmul.mubr.f32.gmra.mxu0 %v658
    %v891 = vpop.f32.mrf.mxu0
    %v892 = vadd.f32 %v574, %v891
    %v893 = vpop.f32.mrf.mxu0
    %894 = vmatprep.mubr.f32.mxu0 0.0
    %895 = vmatmul.mubr.f32.gmra.mxu0 %v661
    %v896 = vpop.f32.mrf.mxu0
    %v897 = vadd.f32 %v574, %v896
    %v898 = vpop.f32.mrf.mxu0
    %899 = vmatprep.mubr.f32.mxu0 0.0
    %900 = vmatmul.mubr.f32.gmra.mxu0 %v664
    %v901 = vpop.f32.mrf.mxu0
    %v902 = vadd.f32 %v574, %v901
    %v903 = vpop.f32.mrf.mxu0
    %904 = vmatprep.mubr.f32.mxu0 0.0
    %905 = vmatmul.mubr.f32.gmra.mxu0 %v667
    %v906 = vpop.f32.mrf.mxu0
    %v907 = vadd.f32 %v574, %v906
    %v908 = vpop.f32.mrf.mxu0
    %909 = vmatprep.mubr.f32.mxu0 0.0
    %910 = vmatmul.mubr.f32.gmra.mxu0 %v670
    %v911 = vpop.f32.mrf.mxu0
    %v912 = vadd.f32 %v574, %v911
    %v913 = vpop.f32.mrf.mxu0
    %914 = vmatprep.mubr.f32.mxu0 0.0
    %915 = vmatmul.mubr.f32.gmra.mxu0 %v673
    %v916 = vpop.f32.mrf.mxu0
    %v917 = vadd.f32 %v574, %v916
    %v918 = vpop.f32.mrf.mxu0
    %919 = vmatprep.mubr.f32.mxu0 0.0
    %920 = vmatmul.mubr.f32.gmra.mxu0 %v676
    %v921 = vpop.f32.mrf.mxu0
    %v922 = vadd.f32 %v574, %v921
    %v923 = vpop.f32.mrf.mxu0
    %924 = vmatprep.mubr.f32.mxu0 0.0
    %925 = vmatmul.mubr.f32.gmra.mxu0 %v679
    %v926 = vpop.f32.mrf.mxu0
    %v927 = vadd.f32 %v574, %v926
    %v928 = vpop.f32.mrf.mxu0
    %929 = vmatprep.mubr.f32.mxu0 0.0
    %930 = vmatmul.mubr.f32.gmra.mxu0 %v682
    %v931 = vpop.f32.mrf.mxu0
    %v932 = vadd.f32 %v574, %v931
    %v933 = vpop.f32.mrf.mxu0
    %934 = vmatprep.mubr.f32.mxu0 0.0
    %935 = vmatmul.mubr.f32.gmra.mxu0 %v685
    %v936 = vpop.f32.mrf.mxu0
    %v937 = vadd.f32 %v574, %v936
    %v938 = vpop.f32.mrf.mxu0
    %939 = vmatprep.mubr.f32.mxu0 0.0
    %940 = vmatmul.mubr.f32.gmra.mxu0 %v688
    %v941 = vpop.f32.mrf.mxu0
    %v942 = vadd.f32 %v574, %v941
    %v943 = vpop.f32.mrf.mxu0
    %944 = vdwg.mxu0
    %v945 = vmax.f32 %v757, 0.0
    %v946 = vmax.f32 %v762, 0.0
    %v947 = vmax.f32 %v767, 0.0
    %v948 = vmax.f32 %v772, 0.0
    %v949 = vmax.f32 %v777, 0.0
    %v950 = vmax.f32 %v782, 0.0
    %v951 = vmax.f32 %v787, 0.0
    %v952 = vmax.f32 %v792, 0.0
    %v953 = vmax.f32 %v797, 0.0
    %v954 = vmax.f32 %v802, 0.0
    %v955 = vmax.f32 %v807, 0.0
    %v956 = vmax.f32 %v812, 0.0
    %v957 = vmax.f32 %v817, 0.0
    %v958 = vmax.f32 %v822, 0.0
    %v959 = vmax.f32 %v827, 0.0
    %v960 = vmax.f32 %v832, 0.0
    %v961 = vmax.f32 %v837, 0.0
    %v962 = vmax.f32 %v842, 0.0
    %v963 = vmax.f32 %v847, 0.0
    %v964 = vmax.f32 %v852, 0.0
    %v965 = vmax.f32 %v857, 0.0
    %v966 = vmax.f32 %v862, 0.0
    %v967 = vmax.f32 %v867, 0.0
    %v968 = vmax.f32 %v872, 0.0
    %v969 = vmax.f32 %v877, 0.0
    %v970 = vmax.f32 %v882, 0.0
    %v971 = vmax.f32 %v887, 0.0
    %v972 = vmax.f32 %v892, 0.0
    %v973 = vmax.f32 %v897, 0.0
    %v974 = vmax.f32 %v902, 0.0
    %v975 = vmax.f32 %v907, 0.0
    %v976 = vmax.f32 %v912, 0.0
    %v977 = vmax.f32 %v917, 0.0
    %v978 = vmax.f32 %v922, 0.0
    %v979 = vmax.f32 %v927, 0.0
    %v980 = vmax.f32 %v932, 0.0
    %v981 = vmax.f32 %v937, 0.0
    %v982 = vmax.f32 %v942, 0.0
    %v983 = vld [vmem:[%s6] sm:$0x1]
    %v984 = vld [vmem:[#allocation2] sm:$0x1]
    %986 = vset.pattern.permute.xlu0 0
    %987 = vperm.xlu0 %986, %v984
    %v988 = vpop.permute.xlu0 %987
    %v990 = vlaneseq
    %v991 = vshrl.u32 %v990, 7
    %v992 = vsub.s32 0, %v991
    %v993 = vrot.slane %v988, %v992
    %v995 = vsel %vm157, %v983, 0
    %v998 = vsel %vm157, %v945, 0
    %v1001 = vsel %vm157, %v946, 0
    %v1004 = vsel %vm157, %v947, 0
    %v1007 = vsel %vm157, %v948, 0
    %v1010 = vsel %vm157, %v949, 0
    %v1013 = vsel %vm157, %v950, 0
    %v1016 = vsel %vm157, %v951, 0
    %v1019 = vsel %vm157, %v952, 0
    %v1022 = vsel %vm157, %v953, 0
    %v1025 = vsel %vm157, %v954, 0
    %v1028 = vsel %vm157, %v955, 0
    %v1031 = vsel %vm157, %v956, 0
    %v1034 = vsel %vm157, %v957, 0
    %v1037 = vsel %vm157, %v958, 0
    %v1040 = vsel %vm157, %v959, 0
    %v1043 = vsel %vm157, %v960, 0
    %v1046 = vsel %vm157, %v961, 0
    %v1049 = vsel %vm157, %v962, 0
    %v1052 = vsel %vm157, %v963, 0
    %v1055 = vsel %vm157, %v964, 0
    %v1058 = vsel %vm157, %v965, 0
    %v1061 = vsel %vm157, %v966, 0
    %v1064 = vsel %vm157, %v967, 0
    %v1067 = vsel %vm157, %v968, 0
    %v1070 = vsel %vm157, %v969, 0
    %v1073 = vsel %vm157, %v970, 0
    %v1076 = vsel %vm157, %v971, 0
    %v1079 = vsel %vm157, %v972, 0
    %v1082 = vsel %vm157, %v973, 0
    %v1085 = vsel %vm157, %v974, 0
    %v1088 = vsel %vm157, %v975, 0
    %v1091 = vsel %vm157, %v976, 0
    %v1094 = vsel %vm157, %v977, 0
    %v1097 = vsel %vm157, %v978, 0
    %v1100 = vsel %vm157, %v979, 0
    %v1103 = vsel %vm157, %v980, 0
    %v1106 = vsel %vm157, %v981, 0
    %v1109 = vsel %vm157, %v982, 0
    %1111 = vmatprep.subr.mxu0 0.0
    %1112 = vmatpush1.xpose.msra.mxu0 %v1043
    %1113 = vmatprep.subr.mxu0 0.0
    %1114 = vmatpush1.xpose.msra.mxu0 %v1040
    %1115 = vmatprep.subr.mxu0 0.0
    %1116 = vmatpush1.xpose.msra.mxu0 %v1037
    %1117 = vmatprep.subr.mxu0 0.0
    %1118 = vmatpush1.xpose.msra.mxu0 %v1034
    %1119 = vmatprep.subr.mxu0 0.0
    %1120 = vmatpush1.xpose.msra.mxu0 %v1031
    %1121 = vmatprep.subr.mxu0 0.0
    %1122 = vmatpush1.xpose.msra.mxu0 %v1028
    %1123 = vmatprep.subr.mxu0 0.0
    %1124 = vmatpush1.xpose.msra.mxu0 %v1025
    %1125 = vmatprep.subr.mxu0 0.0
    %1126 = vmatpush1.xpose.msra.mxu0 %v1022
    %1127 = vmatprep.subr.mxu0 0.0
    %1128 = vmatpush1.xpose.msra.mxu0 %v1019
    %1129 = vmatprep.subr.mxu0 0.0
    %1130 = vmatpush1.xpose.msra.mxu0 %v1016
    %1131 = vmatprep.subr.mxu0 0.0
    %1132 = vmatpush1.xpose.msra.mxu0 %v1013
    %1133 = vmatprep.subr.mxu0 0.0
    %1134 = vmatpush1.xpose.msra.mxu0 %v1010
    %1135 = vmatprep.subr.mxu0 0.0
    %1136 = vmatpush1.xpose.msra.mxu0 %v1007
    %1137 = vmatprep.subr.mxu0 0.0
    %1138 = vmatpush1.xpose.msra.mxu0 %v1004
    %1139 = vmatprep.subr.mxu0 0.0
    %1140 = vmatpush1.xpose.msra.mxu0 %v1001
    %1141 = vmatprep.subr.mxu0 0.0
    %1142 = vmatpush1.xpose.msra.mxu0 %v998
    %1143 = vmatprep.subr.mxu0 0.0
    %1144 = vmatpush2.xpose.msra.mxu0 %v1091
    %1145 = vmatprep.subr.mxu0 0.0
    %1146 = vmatpush2.xpose.msra.mxu0 %v1088
    %1147 = vmatprep.subr.mxu0 0.0
    %1148 = vmatpush2.xpose.msra.mxu0 %v1085
    %1149 = vmatprep.subr.mxu0 0.0
    %1150 = vmatpush2.xpose.msra.mxu0 %v1082
    %1151 = vmatprep.subr.mxu0 0.0
    %1152 = vmatpush2.xpose.msra.mxu0 %v1079
    %1153 = vmatprep.subr.mxu0 0.0
    %1154 = vmatpush2.xpose.msra.mxu0 %v1076
    %1155 = vmatprep.subr.mxu0 0.0
    %1156 = vmatpush2.xpose.msra.mxu0 %v1073
    %1157 = vmatprep.subr.mxu0 0.0
    %1158 = vmatpush2.xpose.msra.mxu0 %v1070
    %1159 = vmatprep.subr.mxu0 0.0
    %1160 = vmatpush2.xpose.msra.mxu0 %v1067
    %1161 = vmatprep.subr.mxu0 0.0
    %1162 = vmatpush2.xpose.msra.mxu0 %v1064
    %1163 = vmatprep.subr.mxu0 0.0
    %1164 = vmatpush2.xpose.msra.mxu0 %v1061
    %1165 = vmatprep.subr.mxu0 0.0
    %1166 = vmatpush2.xpose.msra.mxu0 %v1058
    %1167 = vmatprep.subr.mxu0 0.0
    %1168 = vmatpush2.xpose.msra.mxu0 %v1055
    %1169 = vmatprep.subr.mxu0 0.0
    %1170 = vmatpush2.xpose.msra.mxu0 %v1052
    %1171 = vmatprep.subr.mxu0 0.0
    %1172 = vmatpush2.xpose.msra.mxu0 %v1049
    %1173 = vmatprep.subr.mxu0 0.0
    %1174 = vmatpush2.xpose.msra.mxu0 %v1046
    %1175 = vmatprep.mubr.f32.mxu0 0.0
    %1176 = vmatmul.mubr.f32.gmra.mxu0 %v995
    %v1177 = vpop.f32.mrf.mxu0
    %v1178 = vadd.f32 %v993, %v1177
    %v1179 = vpop.f32.mrf.mxu0
    %v1180 = vadd.f32 %v993, %v1179
    %1181 = vdwg.mxu0
    %1182 = vmatprep.subr.mxu0 0.0
    %1183 = vmatpush1.xpose.msra.mxu0 0.0
    %1184 = vmatprep.subr.mxu0 0.0
    %1185 = vmatpush1.xpose.msra.mxu0 0.0
    %1186 = vmatprep.subr.mxu0 0.0
    %1187 = vmatpush1.xpose.msra.mxu0 0.0
    %1188 = vmatprep.subr.mxu0 0.0
    %1189 = vmatpush1.xpose.msra.mxu0 0.0
    %1190 = vmatprep.subr.mxu0 0.0
    %1191 = vmatpush1.xpose.msra.mxu0 0.0
    %1192 = vmatprep.subr.mxu0 0.0
    %1193 = vmatpush1.xpose.msra.mxu0 0.0
    %1194 = vmatprep.subr.mxu0 0.0
    %1195 = vmatpush1.xpose.msra.mxu0 0.0
    %1196 = vmatprep.subr.mxu0 0.0
    %1197 = vmatpush1.xpose.msra.mxu0 0.0
    %1198 = vmatprep.subr.mxu0 0.0
    %1199 = vmatpush1.xpose.msra.mxu0 0.0
    %1200 = vmatprep.subr.mxu0 0.0
    %1201 = vmatpush1.xpose.msra.mxu0 0.0
    %1202 = vmatprep.subr.mxu0 0.0
    %1203 = vmatpush1.xpose.msra.mxu0 %v1109
    %1204 = vmatprep.subr.mxu0 0.0
    %1205 = vmatpush1.xpose.msra.mxu0 %v1106
    %1206 = vmatprep.subr.mxu0 0.0
    %1207 = vmatpush1.xpose.msra.mxu0 %v1103
    %1208 = vmatprep.subr.mxu0 0.0
    %1209 = vmatpush1.xpose.msra.mxu0 %v1100
    %1210 = vmatprep.subr.mxu0 0.0
    %1211 = vmatpush1.xpose.msra.mxu0 %v1097
    %1212 = vmatprep.subr.mxu0 0.0
    %1213 = vmatpush1.xpose.msra.mxu0 %v1094
    %1214 = vmatprep.subr.mxu0 0.0
    %1215 = vmatpush2.xpose.msra.mxu0 0.0
    %1216 = vmatprep.subr.mxu0 0.0
    %1217 = vmatpush2.xpose.msra.mxu0 0.0
    %1218 = vmatprep.subr.mxu0 0.0
    %1219 = vmatpush2.xpose.msra.mxu0 0.0
    %1220 = vmatprep.subr.mxu0 0.0
    %1221 = vmatpush2.xpose.msra.mxu0 0.0
    %1222 = vmatprep.subr.mxu0 0.0
    %1223 = vmatpush2.xpose.msra.mxu0 0.0
    %1224 = vmatprep.subr.mxu0 0.0
    %1225 = vmatpush2.xpose.msra.mxu0 0.0
    %1226 = vmatprep.subr.mxu0 0.0
    %1227 = vmatpush2.xpose.msra.mxu0 0.0
    %1228 = vmatprep.subr.mxu0 0.0
    %1229 = vmatpush2.xpose.msra.mxu0 0.0
    %1230 = vmatprep.subr.mxu0 0.0
    %1231 = vmatpush2.xpose.msra.mxu0 0.0
    %1232 = vmatprep.subr.mxu0 0.0
    %1233 = vmatpush2.xpose.msra.mxu0 0.0
    %1234 = vmatprep.subr.mxu0 0.0
    %1235 = vmatpush2.xpose.msra.mxu0 0.0
    %1236 = vmatprep.subr.mxu0 0.0
    %1237 = vmatpush2.xpose.msra.mxu0 0.0
    %1238 = vmatprep.subr.mxu0 0.0
    %1239 = vmatpush2.xpose.msra.mxu0 0.0
    %1240 = vmatprep.subr.mxu0 0.0
    %1241 = vmatpush2.xpose.msra.mxu0 0.0
    %1242 = vmatprep.subr.mxu0 0.0
    %1243 = vmatpush2.xpose.msra.mxu0 0.0
    %1244 = vmatprep.subr.mxu0 0.0
    %1245 = vmatpush2.xpose.msra.mxu0 0.0
    %1246 = vmatprep.mubr.f32.mxu0 0.0
    %1247 = vmatmul.mubr.f32.gmra.mxu0 %v995
    %v1248 = vpop.f32.mrf.mxu0
    %v1249 = vadd.f32 %v993, %v1248
    %v1250 = vpop.f32.mrf.mxu0
    %1251 = vdwg.mxu0
    %v1252 = vxor.u32 %v1178, 2147483648
    %v1253 = vxor.u32 %v1180, 2147483648
    %v1254 = vxor.u32 %v1249, 2147483648
    %v1255 = vmul.f32 %v1252, 1.442695
    %v1256 = vpow.pop %v1255
    %v1257 = vmul.f32 %v1253, 1.442695
    %v1258 = vpow.pop %v1257
    %v1259 = vmul.f32 %v1254, 1.442695
    %v1260 = vpow.pop %v1259
    %v1261 = vadd.f32 %v1256, 1.0
    %v1262 = vadd.f32 %v1258, 1.0
    %v1263 = vadd.f32 %v1260, 1.0
    %v1264 = vrcp.pop %v1261
    %v1265 = vmul.f32 1.0, %v1264
    %v1266 = vrcp.pop %v1262
    %v1267 = vmul.f32 1.0, %v1266
    %v1268 = vrcp.pop %v1263
    %v1269 = vmul.f32 1.0, %v1268
    %v1273 = vcombine.low %v1265, %v1267
    %v1275 = vunpack.c.l.s4 1966171168
    %v1276 = vunpack.c.0.s8 %v1275
    %v1277 = vlaneseq
    %v1278 = vshrl.u32 %v1277, 7
    %v1279 = vsub.s32 %v1276, %v1278
    %v1280 = vrot.slane %v1273, %v1279
    %v1282 = vunpack.c.l.s4 1966171168
    %v1283 = vunpack.c.0.s8 %v1282
    %v1284 = vlaneseq
    %v1285 = vshrl.u32 %v1284, 7
    %v1286 = vsub.s32 %v1283, %v1285
    %v1287 = vrot.slane %v1269, %v1286
    %v1288 = vcombine.low %v1280, %v1287
    %v1290 = vunpack.c.l.s4 1966171168
    %v1291 = vunpack.c.0.s8 %v1290
    %v1292 = vlaneseq
    %v1293 = vshrl.u32 %v1292, 7
    %v1294 = vsub.s32 %v1291, %v1293
    %v1295 = vrot.slane %v1288, %v1294
    %v1297 = vlaneseq
    %vm1298 = vcmp.ge.s32.totalorder %v1297, 0
    %vm1299 = vcmp.lt.s32.totalorder %v1297, 300
    %vm1300 = vmand %vm1298, %vm1299
    %1301 = vst.msk [vmem:[#allocation3] sm:$0x7] %vm1300, %v1295
    // Predicated region
    $region34: #{tpu_custom_call.1} parent=1 // pred_check
      _
    $region35: #{tpu_custom_call.1} parent=1 // pred_check_branch
      %1303 = sbr.rel (0) target = $region37
    $region36: #{tpu_custom_call.1} parent=1 // pred_region
      %s1305 = ssub.s32 48, 48
      %1306 = vsyncadd [#allocation4], %s1305
      %s1308 = sshll.u32 [#allocation3], 4
      %s1309 = int_to_ptr.vmem [resolvable:$true] %s1308
      %1311 = dma.vmem_to_hbm [thread:$0]  %s1309, 48, %s8, [#allocation4]
    $region37: #{tpu_custom_call.1} parent=1 // pred_fallthru
      _
    // Predicated region
    $region38: #{tpu_custom_call.1} parent=1 // pred_check
      _
    $region39: #{tpu_custom_call.1} parent=1 // pred_check_branch
      %1313 = sbr.rel (0) target = $region41
    $region40: #{tpu_custom_call.1} parent=1 // pred_region
      %1314 = dma.done [#allocation4], 48
    $region41: #{tpu_custom_call.1} parent=1 // pred_fallthru
      _
    %1315 = vsyncpa [#allocation4], 1

</llo_original>
